<compile_context>
chip_gen: v6e
topology: v6e:2x2x1
jax: 0.10.0
libtpu: 0.0.40
codegen_flags: <defaults>
</compile_context>

<pallas_src>
import functools

import jax
import jax.numpy as jnp
from jax.experimental import pallas as pl
from jax.experimental.pallas import tpu as pltpu

HIDDEN = 500  # hidden width of the original module


def _round_up(n, m):
    return ((n + m - 1) // m) * m


def mlp_kernel(x_ref, w1_ref, b1_ref, w2t_ref, b2_ref, logits_ref, idx_ref, *, act):
    # x_ref:    (bm, OBS)        bf16
    # w1_ref:   (OBS, hid_p)     bf16
    # b1_ref:   (1, hid_p)       f32
    # w2t_ref:  (act_p, hid_p)   bf16   (transposed dense2 weight)
    # b2_ref:   (1, act_p)       f32
    # logits_ref: (bm, act_p)    f32
    # idx_ref:    (bm, 1)        i32
    x = x_ref[...]

    # dense1 + ReLU: bf16 MXU inputs, f32 accumulation, f32 epilogue.
    h = jnp.dot(x, w1_ref[...], preferred_element_type=jnp.float32)
    h = jnp.maximum(h + b1_ref[...], 0.0)

    # dense2: contract the hidden axis against the transposed weight (act_p, hid_p).
    y = jax.lax.dot_general(
        h.astype(jnp.bfloat16), w2t_ref[...],
        dimension_numbers=(((1,), (1,)), ((), ())),
        preferred_element_type=jnp.float32)
    y = y + b2_ref[...]

    logits_ref[...] = y.astype(logits_ref.dtype)

    # Fused predict(): argmax over the real action lanes (pad lanes masked to -inf).
    bm, ap = y.shape
    lane = jax.lax.broadcasted_iota(jnp.int32, (bm, ap), 1)
    masked = jnp.where(lane < act, y, -jnp.inf)
    row_max = jnp.max(masked, axis=1, keepdims=True)
    # first index achieving the max (matches jnp/torch argmax tie-breaking)
    idx = jnp.min(jnp.where(masked == row_max, lane, ap), axis=1, keepdims=True)
    idx_ref[...] = idx.astype(jnp.int32)


def pack_params(w1, b1, w2, b2):
    """One-time packing of the module parameters for the kernel.

    w1: (obs, hidden), b1: (1, hidden) or (hidden,), w2: (hidden, act), b2: (1, act) or (act,).
    Returns a dict of padded / bf16 / transposed tensors plus the real dims.
    """
    obs, hidden = w1.shape
    act = w2.shape[1]
    hid_p = _round_up(hidden, 128)            # 500 -> 512
    act_p = _round_up(max(act, 8), 8)         # 8   -> 8  (rows of the transposed weight)

    w1_p = jnp.zeros((obs, hid_p), jnp.bfloat16).at[:, :hidden].set(
        w1.astype(jnp.bfloat16))
    b1_p = jnp.zeros((1, hid_p), jnp.float32).at[:, :hidden].set(
        jnp.reshape(b1, (1, hidden)).astype(jnp.float32))
    # dense2 weight stored transposed: (act_p, hid_p) bf16, ~8 KiB instead of 128 KiB.
    w2t_p = jnp.zeros((act_p, hid_p), jnp.bfloat16).at[:act, :hidden].set(
        jnp.transpose(w2).astype(jnp.bfloat16))
    b2_p = jnp.zeros((1, act_p), jnp.float32).at[:, :act].set(
        jnp.reshape(b2, (1, act)).astype(jnp.float32))

    return {"w1": w1_p, "b1": b1_p, "w2t": w2t_p, "b2": b2_p,
            "obs": obs, "hidden": hidden, "act": act}


def mlp_forward(x, params, *, batch_block=256):
    """x: (B, obs) float; params: output of pack_params().
    Returns (logits (B, act) f32, argmax actions (B,) int32)."""
    w1_p, b1_p, w2t_p, b2_p = params["w1"], params["b1"], params["w2t"], params["b2"]
    act = params["act"]
    B, obs = x.shape
    hid_p = w1_p.shape[1]
    act_p = w2t_p.shape[0]

    kernel = functools.partial(mlp_kernel, act=act)

    if B <= batch_block:
        # Small batch: gridless call (no 1-step pipeline tax, no double buffers).
        bm = b_p = _round_up(max(B, 16), 16)      # bf16 sublane tile
        grid = None
    else:
        # Large batch: grid over the batch dim; parallel semantics shards grid
        # steps across TensorCores on v7x. Weights use constant-index specs so
        # they stay VMEM-resident across steps.
        bm = batch_block
        b_p = _round_up(B, bm)
        grid = (b_p // bm,)

    # Activations as bf16 in the wrapper (halves x DMA vs f32 + in-kernel cast).
    x_p = jnp.zeros((b_p, obs), jnp.bfloat16).at[:B, :].set(x.astype(jnp.bfloat16))

    out_shape = (
        jax.ShapeDtypeStruct((b_p, act_p), jnp.float32),
        jax.ShapeDtypeStruct((b_p, 1), jnp.int32),
    )

    if grid is None:
        vmem = pl.BlockSpec(memory_space=pltpu.MemorySpace.VMEM)
        logits_p, idx_p = pl.pallas_call(
            kernel,
            out_shape=out_shape,
            in_specs=[vmem] * 5,
            out_specs=(vmem, vmem),
        )(x_p, w1_p, b1_p, w2t_p, b2_p)
    else:
        logits_p, idx_p = pl.pallas_call(
            kernel,
            out_shape=out_shape,
            grid=grid,
            in_specs=[
                pl.BlockSpec((bm, obs), lambda i: (i, 0)),
                pl.BlockSpec((obs, hid_p), lambda i: (0, 0)),    # weights: constant block
                pl.BlockSpec((1, hid_p), lambda i: (0, 0)),
                pl.BlockSpec((act_p, hid_p), lambda i: (0, 0)),
                pl.BlockSpec((1, act_p), lambda i: (0, 0)),
            ],
            out_specs=(
                pl.BlockSpec((bm, act_p), lambda i: (i, 0)),
                pl.BlockSpec((bm, 1), lambda i: (i, 0)),
            ),
            compiler_params=pltpu.CompilerParams(
                dimension_semantics=("parallel",)),
        )(x_p, w1_p, b1_p, w2t_p, b2_p)

    return logits_p[:B, :act], idx_p[:B, 0]


def init_params(key, observation_size, action_size):
    # Deterministic init mimicking torch.nn.Linear (uniform +/- 1/sqrt(fan_in)).
    k1, k2, k3, k4 = jax.random.split(key, 4)
    bound1 = 1.0 / jnp.sqrt(observation_size)
    bound2 = 1.0 / jnp.sqrt(HIDDEN)
    w1 = jax.random.uniform(k1, (observation_size, HIDDEN), jnp.float32,
                            -bound1, bound1)
    b1 = jax.random.uniform(k2, (1, HIDDEN), jnp.float32, -bound1, bound1)
    w2 = jax.random.uniform(k3, (HIDDEN, action_size), jnp.float32,
                            -bound2, bound2)
    b2 = jax.random.uniform(k4, (1, action_size), jnp.float32, -bound2, bound2)
    return w1, b1, w2, b2


if __name__ == "__main__":
    observation_size = 32
    action_size = 8
    batch = 8

    key = jax.random.PRNGKey(0)
    kx, kp, kb = jax.random.split(key, 3)
    x = jax.random.normal(kx, (batch, observation_size), jnp.float32)
    w1, b1, w2, b2 = init_params(kp, observation_size, action_size)

    # Pack parameters ONCE (padding / bf16 cast / transpose hoisted out of per-call path).
    params = pack_params(w1, b1, w2, b2)
    params = jax.block_until_ready(params)

    # --- small batch: gridless path ---
    logits, actions = mlp_forward(x, params)
    logits, actions = jax.block_until_ready((logits, actions))

    # Reference check in plain f32 JAX (same semantics as the PyTorch forward).
    # Tolerance accounts for bf16 MXU inputs with f32 accumulation.
    ref = jnp.maximum(x @ w1 + b1, 0.0) @ w2 + b2
    assert logits.shape == (batch, action_size)
    assert actions.shape == (batch,)
    assert jnp.allclose(logits, ref, atol=3e-2, rtol=3e-2)
    # Fused predict() must agree with argmax of the kernel's own logits.
    assert jnp.array_equal(actions, jnp.argmax(logits, axis=1))

    # --- larger batch: grid-over-batch path (parallel batch axis, resident weights) ---
    big_batch = 512
    xb = jax.random.normal(kb, (big_batch, observation_size), jnp.float32)
    logits_b, actions_b = mlp_forward(xb, params, batch_block=256)
    logits_b, actions_b = jax.block_until_ready((logits_b, actions_b))
    ref_b = jnp.maximum(xb @ w1 + b1, 0.0) @ w2 + b2
    assert logits_b.shape == (big_batch, action_size)
    assert actions_b.shape == (big_batch,)
    assert jnp.allclose(logits_b, ref_b, atol=3e-2, rtol=3e-2)
    assert jnp.array_equal(actions_b, jnp.argmax(logits_b, axis=1))

    print("KERNEL_OK")
</pallas_src>

<mosaic_0001>
module attributes {stable_mosaic.version = 11 : i64} {
  func.func @mlp_kernel(%arg0: memref<16x32xbf16, #tpu.memory_space<vmem>>, %arg1: memref<32x512xbf16, #tpu.memory_space<vmem>>, %arg2: memref<1x512xf32, #tpu.memory_space<vmem>>, %arg3: memref<8x512xbf16, #tpu.memory_space<vmem>>, %arg4: memref<1x8xf32, #tpu.memory_space<vmem>>, %arg5: memref<16x8xf32, #tpu.memory_space<vmem>>, %arg6: memref<16x1xi32, #tpu.memory_space<vmem>>) attributes {dimension_semantics = [], scalar_prefetch = 0 : i64, scratch_operands = 0 : i64, tpu.core_type = #tpu.core_type<tc>} {
    %c0 = arith.constant 0 : index
    %c0_0 = arith.constant 0 : index
    %0 = vector.load %arg0[%c0, %c0_0] : memref<16x32xbf16, #tpu.memory_space<vmem>>, vector<16x32xbf16>
    %c0_1 = arith.constant 0 : index
    %c0_2 = arith.constant 0 : index
    %1 = vector.load %arg1[%c0_1, %c0_2] : memref<32x512xbf16, #tpu.memory_space<vmem>>, vector<32x512xbf16>
    %cst = arith.constant dense<0.000000e+00> : vector<16x512xf32>
    %2 = tpu.matmul %0, %1, %cst {dimension_numbers = #tpu.dot_dimension_numbers<[1], [0], [0], [1], [0, 0, 1, 1], [], []>} : vector<16x32xbf16>, vector<32x512xbf16>, vector<16x512xf32> -> vector<16x512xf32>
    %c0_3 = arith.constant 0 : index
    %c0_4 = arith.constant 0 : index
    %3 = vector.load %arg2[%c0_3, %c0_4] : memref<1x512xf32, #tpu.memory_space<vmem>>, vector<1x512xf32>
    %4 = vector.broadcast %3 : vector<1x512xf32> to vector<16x512xf32>
    %5 = arith.addf %2, %4 : vector<16x512xf32>
    %cst_5 = arith.constant 0.000000e+00 : f32
    %6 = vector.broadcast %cst_5 : f32 to vector<16x512xf32>
    %7 = arith.maximumf %5, %6 : vector<16x512xf32>
    %8 = arith.truncf %7 : vector<16x512xf32> to vector<16x512xbf16>
    %c0_6 = arith.constant 0 : index
    %c0_7 = arith.constant 0 : index
    %9 = vector.load %arg3[%c0_6, %c0_7] : memref<8x512xbf16, #tpu.memory_space<vmem>>, vector<8x512xbf16>
    %cst_8 = arith.constant dense<0.000000e+00> : vector<16x8xf32>
    %10 = tpu.matmul %8, %9, %cst_8 {dimension_numbers = #tpu.dot_dimension_numbers<[1], [1], [0], [0], [0, 0, 1, 0], [], []>} : vector<16x512xbf16>, vector<8x512xbf16>, vector<16x8xf32> -> vector<16x8xf32>
    %c0_9 = arith.constant 0 : index
    %c0_10 = arith.constant 0 : index
    %11 = vector.load %arg4[%c0_9, %c0_10] : memref<1x8xf32, #tpu.memory_space<vmem>>, vector<1x8xf32>
    %12 = vector.broadcast %11 : vector<1x8xf32> to vector<16x8xf32>
    %13 = arith.addf %10, %12 : vector<16x8xf32>
    %c0_11 = arith.constant 0 : index
    %c0_12 = arith.constant 0 : index
    %14 = vector.load %arg5[%c0_11, %c0_12] : memref<16x8xf32, #tpu.memory_space<vmem>>, vector<16x8xf32>
    tpu.vector_store %arg5[%c0_11, %c0_12], %13 {strides = array<i32>} : memref<16x8xf32, #tpu.memory_space<vmem>>, vector<16x8xf32>,
    %15 = tpu.iota {dimensions = array<i32: 1>} : vector<16x8xi32>
    %c8_i32 = arith.constant 8 : i32
    %16 = vector.broadcast %c8_i32 : i32 to vector<16x8xi32>
    %17 = arith.cmpi slt, %15, %16 : vector<16x8xi32>
    %cst_13 = arith.constant 0xFF800000 : f32
    %18 = vector.broadcast %cst_13 : f32 to vector<16x8xf32>
    %19 = arith.select %17, %13, %18 : vector<16x8xi1>, vector<16x8xf32>
    %cst_14 = arith.constant dense<0xFF800000> : vector<16xf32>
    %20 = vector.multi_reduction <maximumf>, %19, %cst_14 [1] : vector<16x8xf32> to vector<16xf32>
    %21 = vector.shape_cast %20 : vector<16xf32> to vector<16x1xf32>
    %22 = vector.broadcast %21 : vector<16x1xf32> to vector<16x8xf32>
    %23 = arith.cmpf oeq, %19, %22 : vector<16x8xf32>
    %c8_i32_15 = arith.constant 8 : i32
    %24 = vector.broadcast %c8_i32_15 : i32 to vector<16x8xi32>
    %25 = arith.select %23, %15, %24 : vector<16x8xi1>, vector<16x8xi32>
    %cst_16 = arith.constant dense<2147483647> : vector<16xi32>
    %26 = vector.multi_reduction <minsi>, %25, %cst_16 [1] : vector<16x8xi32> to vector<16xi32>
    %27 = vector.shape_cast %26 : vector<16xi32> to vector<16x1xi32>
    %c0_17 = arith.constant 0 : index
    %c0_18 = arith.constant 0 : index
    %28 = vector.load %arg6[%c0_17, %c0_18] : memref<16x1xi32, #tpu.memory_space<vmem>>, vector<16x1xi32>
    tpu.vector_store %arg6[%c0_17, %c0_18], %27 {strides = array<i32>} : memref<16x1xi32, #tpu.memory_space<vmem>>, vector<16x1xi32>,
    return
  }
}

</mosaic_0001>

<llo_original>
// kernel: tpu_custom_call.1
$region0: #{tpu_custom_call.1}
  #allocation0 [shape = 'u32[]', space=smem, size = 0x4, offset = 0x4, fixed_abs, tag = 'smem constant byte address 0x4 - core index']
  #allocation1 [shape = 'u32[144,128]{1,0:T(1,128)}', space=vmem, size = 0x12000, scoped, tag = 'internal scratch']
  %s0 = inlined_call_operand.hbm [shape: bf16[16,32], index: 0, kind: input, shape index: {}]
  %s1 = inlined_call_operand.hbm [shape: bf16[32,512], index: 1, kind: input, shape index: {}]
  %s2 = inlined_call_operand.hbm [shape: f32[1,512], index: 2, kind: input, shape index: {}]
  %s3 = inlined_call_operand.hbm [shape: bf16[8,512], index: 3, kind: input, shape index: {}]
  %s4 = inlined_call_operand.vmem [shape: f32[1,8], index: 4, kind: input, shape index: {}]
  %s5 = inlined_call_operand.vmem [shape: f32[16,8], index: 5, kind: output, shape index: {0}]
  %s6 = inlined_call_operand.vmem [shape: s32[16,1], index: 6, kind: output, shape index: {1}]
  %7 = xla_tuple %s5, %s6
  %s8 = sld [smem:[#allocation0]]
  $region54: #{tpu_custom_call.1} parent=0
    _
  %s10 = ssub.s32 1, %s8
  %s11 = scalar_select 0, %s10, %s8
  $region1: #{tpu_custom_call.1} parent=0
    #allocation2 [shape = 'u8[4096]{0}', space=vmem, size = 0x1000, scoped, tag = 'input window, operand 0, single buffered']
    #allocation3 [shape = 's32[1]{0}', space=sflag, size = 0x4, scoped, tag = 'scoped memory for tpu_custom_call.1']
    #allocation4 [shape = 'u8[32768]{0}', space=vmem, size = 0x8000, scoped, tag = 'input window, operand 1, single buffered']
    #allocation5 [shape = 's32[1]{0}', space=sflag, size = 0x4, scoped, tag = 'scoped memory for tpu_custom_call.1']
    #allocation6 [shape = 'u8[2048]{0}', space=vmem, size = 0x800, scoped, tag = 'input window, operand 2, single buffered']
    #allocation7 [shape = 'u8[8192]{0}', space=vmem, size = 0x2000, scoped, tag = 'input window, operand 3, single buffered']
    #allocation8 [shape = 's32[1]{0}', space=sflag, size = 0x4, scoped, tag = 'scoped memory for tpu_custom_call.1']
    %12 = vsyncpa [#allocation3], 0
    %13 = vsyncpa [#allocation5], 0
    %14 = vsyncpa [#allocation8], 0
    // Predicated region
    $region2: #{tpu_custom_call.1} parent=1 // pred_check
      _
    $region3: #{tpu_custom_call.1} parent=1 // pred_check_branch
      %16 = sbr.rel (0) target = $region5
    $region4: #{tpu_custom_call.1} parent=1 // pred_region
      %s18 = ssub.s32 128, 128
      %19 = vsyncadd [#allocation3], %s18
      %s20 = sshll.u32 [#allocation2], 4
      %s21 = int_to_ptr.vmem [resolvable:$true] %s20
      %26 = dma.hbm_to_vmem [thread:$0]  %s0, 128, %s21, [#allocation3], 64, 64, 4
    $region5: #{tpu_custom_call.1} parent=1 // pred_fallthru
      _
    // Predicated region
    $region6: #{tpu_custom_call.1} parent=1 // pred_check
      _
    $region7: #{tpu_custom_call.1} parent=1 // pred_check_branch
      %28 = sbr.rel (0) target = $region9
    $region8: #{tpu_custom_call.1} parent=1 // pred_region
      %s30 = ssub.s32 1024, 1024
      %31 = vsyncadd [#allocation5], %s30
      %s32 = sshll.u32 [#allocation4], 4
      %s33 = int_to_ptr.vmem [resolvable:$true] %s32
      %38 = dma.hbm_to_vmem [thread:$0]  %s1, 1024, %s33, [#allocation5], 256, 256, 16
    $region9: #{tpu_custom_call.1} parent=1 // pred_fallthru
      _
    // Predicated region
    $region10: #{tpu_custom_call.1} parent=1 // pred_check
      _
    $region11: #{tpu_custom_call.1} parent=1 // pred_check_branch
      %40 = sbr.rel (0) target = $region13
    $region12: #{tpu_custom_call.1} parent=1 // pred_region
      %s42 = ssub.s32 64, 64
      %43 = vsyncadd [#allocation5], %s42
      %s45 = sshll.u32 [#allocation6], 4
      %s46 = int_to_ptr.vmem [resolvable:$true] %s45
      %48 = dma.hbm_to_vmem [thread:$0]  %s2, 64, %s46, [#allocation5]
    $region13: #{tpu_custom_call.1} parent=1 // pred_fallthru
      _
    // Predicated region
    $region14: #{tpu_custom_call.1} parent=1 // pred_check
      _
    $region15: #{tpu_custom_call.1} parent=1 // pred_check_branch
      %50 = sbr.rel (0) target = $region17
    $region16: #{tpu_custom_call.1} parent=1 // pred_region
      %s52 = ssub.s32 256, 256
      %53 = vsyncadd [#allocation8], %s52
      %s55 = sshll.u32 [#allocation7], 4
      %s56 = int_to_ptr.vmem [resolvable:$true] %s55
      %58 = dma.hbm_to_vmem [thread:$0]  %s3, 256, %s56, [#allocation8]
    $region17: #{tpu_custom_call.1} parent=1 // pred_fallthru
      _
    // Predicated region
    $region18: #{tpu_custom_call.1} parent=1 // pred_check
      _
    $region19: #{tpu_custom_call.1} parent=1 // pred_check_branch
      %60 = sbr.rel (0) target = $region21
    $region20: #{tpu_custom_call.1} parent=1 // pred_region
      _
    $region21: #{tpu_custom_call.1} parent=1 // pred_fallthru
      _
    // Predicated region
    $region22: #{tpu_custom_call.1} parent=1 // pred_check
      _
    $region23: #{tpu_custom_call.1} parent=1 // pred_check_branch
      %62 = sbr.rel (0) target = $region25
    $region24: #{tpu_custom_call.1} parent=1 // pred_region
      %63 = dma.done [#allocation3], 128
    $region25: #{tpu_custom_call.1} parent=1 // pred_fallthru
      _
    // Predicated region
    $region26: #{tpu_custom_call.1} parent=1 // pred_check
      _
    $region27: #{tpu_custom_call.1} parent=1 // pred_check_branch
      %65 = sbr.rel (0) target = $region29
    $region28: #{tpu_custom_call.1} parent=1 // pred_region
      %66 = dma.done [#allocation5], 1024
    $region29: #{tpu_custom_call.1} parent=1 // pred_fallthru
      _
    // Predicated region
    $region30: #{tpu_custom_call.1} parent=1 // pred_check
      _
    $region31: #{tpu_custom_call.1} parent=1 // pred_check_branch
      %68 = sbr.rel (0) target = $region33
    $region32: #{tpu_custom_call.1} parent=1 // pred_region
      %69 = dma.done [#allocation5], 64
    $region33: #{tpu_custom_call.1} parent=1 // pred_fallthru
      _
    // Predicated region
    $region34: #{tpu_custom_call.1} parent=1 // pred_check
      _
    $region35: #{tpu_custom_call.1} parent=1 // pred_check_branch
      %71 = sbr.rel (0) target = $region37
    $region36: #{tpu_custom_call.1} parent=1 // pred_region
      %72 = dma.done [#allocation8], 256
    $region37: #{tpu_custom_call.1} parent=1 // pred_fallthru
      _
    %v74 = vld [vmem:[#allocation2] sm:$0xf]
    %v75 = vld [vmem:[#allocation2 + $0x4] sm:$0xf]
    %v76 = vld [vmem:[#allocation4] sm:$0xff]
    %v77 = vld [vmem:[#allocation4 + $0x8] sm:$0xff]
    %v78 = vld [vmem:[#allocation4 + $0x10] sm:$0xff]
    %v79 = vld [vmem:[#allocation4 + $0x18] sm:$0xff]
    %v80 = vld [vmem:[#allocation4 + $0x20] sm:$0xff]
    %v81 = vld [vmem:[#allocation4 + $0x28] sm:$0xff]
    %v82 = vld [vmem:[#allocation4 + $0x30] sm:$0xff]
    %v83 = vld [vmem:[#allocation4 + $0x38] sm:$0xff]
    %v84 = vld [vmem:[#allocation6] sm:$0xf]
    %v86 = vlaneseq
    %v87 = vshrl.u32 %v86, 7
    %v88 = vsub.s32 0, %v87
    %v89 = vrot.slane %v84, %v88
    %v90 = vlaneseq
    %v91 = vshrl.u32 %v90, 7
    %v92 = vsub.s32 1, %v91
    %v93 = vrot.slane %v84, %v92
    %v94 = vlaneseq
    %v95 = vshrl.u32 %v94, 7
    %v96 = vsub.s32 2, %v95
    %v97 = vrot.slane %v84, %v96
    %v98 = vlaneseq
    %v99 = vshrl.u32 %v98, 7
    %v100 = vsub.s32 3, %v99
    %v101 = vrot.slane %v84, %v100
    %v108 = vunpack.c.l.b16 %v74
    %v109 = vunpack.c.l.b16 %v75
    %v110 = vpack.c.b16 %v109, %v108
    %v119 = vunpack.c.l.b16 %v76
    %v120 = vunpack.c.h.b16 %v76
    %v121 = vunpack.c.l.b16 %v77
    %v122 = vunpack.c.h.b16 %v77
    %v123 = vunpack.c.l.b16 %v78
    %v124 = vunpack.c.h.b16 %v78
    %v125 = vunpack.c.l.b16 %v79
    %v126 = vunpack.c.h.b16 %v79
    %v127 = vunpack.c.l.b16 %v80
    %v128 = vunpack.c.h.b16 %v80
    %v129 = vunpack.c.l.b16 %v81
    %v130 = vunpack.c.h.b16 %v81
    %v131 = vunpack.c.l.b16 %v82
    %v132 = vunpack.c.h.b16 %v82
    %v133 = vunpack.c.l.b16 %v83
    %v134 = vunpack.c.h.b16 %v83
    %v135 = vpack.c.b16 %v123, %v119
    %v136 = vpack.c.b16 %v124, %v120
    %v137 = vpack.c.b16 %v125, %v121
    %v138 = vpack.c.b16 %v126, %v122
    %v139 = vpack.c.b16 %v131, %v127
    %v140 = vpack.c.b16 %v132, %v128
    %v141 = vpack.c.b16 %v133, %v129
    %v142 = vpack.c.b16 %v134, %v130
    %vm151 = vcmask 261120
    %v153 = vsel %vm151, %v110, 0
    %155 = vmatprep.subr.bf16.mxu0 0
    %156 = vmatpush1.bf16.msra.mxu0 0
    %157 = vmatprep.subr.bf16.mxu0 0
    %158 = vmatpush1.bf16.msra.mxu0 0
    %159 = vmatprep.subr.bf16.mxu0 0
    %160 = vmatpush1.bf16.msra.mxu0 0
    %161 = vmatprep.subr.bf16.mxu0 0
    %162 = vmatpush1.bf16.msra.mxu0 0
    %163 = vmatprep.subr.bf16.mxu0 0
    %164 = vmatpush1.bf16.msra.mxu0 0
    %165 = vmatprep.subr.bf16.mxu0 0
    %166 = vmatpush1.bf16.msra.mxu0 0
    %167 = vmatprep.subr.bf16.mxu0 %v140
    %168 = vmatpush1.bf16.msra.mxu0 %v139
    %169 = vmatprep.subr.bf16.mxu0 %v136
    %170 = vmatpush1.bf16.msra.mxu0 %v135
    %171 = vmatprep.subr.bf16.mxu0 0
    %172 = vmatpush2.bf16.msra.mxu0 0
    %173 = vmatprep.subr.bf16.mxu0 0
    %174 = vmatpush2.bf16.msra.mxu0 0
    %175 = vmatprep.subr.bf16.mxu0 0
    %176 = vmatpush2.bf16.msra.mxu0 0
    %177 = vmatprep.subr.bf16.mxu0 0
    %178 = vmatpush2.bf16.msra.mxu0 0
    %179 = vmatprep.subr.bf16.mxu0 0
    %180 = vmatpush2.bf16.msra.mxu0 0
    %181 = vmatprep.subr.bf16.mxu0 0
    %182 = vmatpush2.bf16.msra.mxu0 0
    %183 = vmatprep.subr.bf16.mxu0 0
    %184 = vmatpush2.bf16.msra.mxu0 0
    %185 = vmatprep.subr.bf16.mxu0 0
    %186 = vmatpush2.bf16.msra.mxu0 0
    %187 = vmatprep.mubr.bf16.mxu0 0
    %188 = vmatmul.mubr.bf16.gmra.mxu0 %v153
    %v189 = vpop.f32.mrf.mxu0
    %v190 = vadd.f32 %v89, %v189
    %v191 = vpop.f32.mrf.mxu0
    %v192 = vadd.f32 %v93, %v191
    %v193 = vpop.f32.mrf.mxu0
    %v194 = vadd.f32 %v89, %v193
    %v195 = vpop.f32.mrf.mxu0
    %v196 = vadd.f32 %v93, %v195
    %197 = vdwg.mxu0
    %198 = vmatprep.subr.bf16.mxu0 0
    %199 = vmatpush1.bf16.msra.mxu0 0
    %200 = vmatprep.subr.bf16.mxu0 0
    %201 = vmatpush1.bf16.msra.mxu0 0
    %202 = vmatprep.subr.bf16.mxu0 0
    %203 = vmatpush1.bf16.msra.mxu0 0
    %204 = vmatprep.subr.bf16.mxu0 0
    %205 = vmatpush1.bf16.msra.mxu0 0
    %206 = vmatprep.subr.bf16.mxu0 0
    %207 = vmatpush1.bf16.msra.mxu0 0
    %208 = vmatprep.subr.bf16.mxu0 0
    %209 = vmatpush1.bf16.msra.mxu0 0
    %210 = vmatprep.subr.bf16.mxu0 %v142
    %211 = vmatpush1.bf16.msra.mxu0 %v141
    %212 = vmatprep.subr.bf16.mxu0 %v138
    %213 = vmatpush1.bf16.msra.mxu0 %v137
    %214 = vmatprep.subr.bf16.mxu0 0
    %215 = vmatpush2.bf16.msra.mxu0 0
    %216 = vmatprep.subr.bf16.mxu0 0
    %217 = vmatpush2.bf16.msra.mxu0 0
    %218 = vmatprep.subr.bf16.mxu0 0
    %219 = vmatpush2.bf16.msra.mxu0 0
    %220 = vmatprep.subr.bf16.mxu0 0
    %221 = vmatpush2.bf16.msra.mxu0 0
    %222 = vmatprep.subr.bf16.mxu0 0
    %223 = vmatpush2.bf16.msra.mxu0 0
    %224 = vmatprep.subr.bf16.mxu0 0
    %225 = vmatpush2.bf16.msra.mxu0 0
    %226 = vmatprep.subr.bf16.mxu0 0
    %227 = vmatpush2.bf16.msra.mxu0 0
    %228 = vmatprep.subr.bf16.mxu0 0
    %229 = vmatpush2.bf16.msra.mxu0 0
    %230 = vmatprep.mubr.bf16.mxu0 0
    %231 = vmatmul.mubr.bf16.gmra.mxu0 %v153
    %v232 = vpop.f32.mrf.mxu0
    %v233 = vadd.f32 %v97, %v232
    %v234 = vpop.f32.mrf.mxu0
    %v235 = vadd.f32 %v101, %v234
    %v236 = vpop.f32.mrf.mxu0
    %v237 = vadd.f32 %v97, %v236
    %v238 = vpop.f32.mrf.mxu0
    %v239 = vadd.f32 %v101, %v238
    %240 = vdwg.mxu0
    %v241 = vmax.f32 %v190, 0.0
    %v242 = vmax.f32 %v192, 0.0
    %v243 = vmax.f32 %v233, 0.0
    %v244 = vmax.f32 %v235, 0.0
    %v245 = vmax.f32 %v194, 0.0
    %v246 = vmax.f32 %v196, 0.0
    %v247 = vmax.f32 %v237, 0.0
    %v248 = vmax.f32 %v239, 0.0
    %v249 = vpack.c.bf16 %v245, %v241
    %v250 = vpack.c.bf16 %v246, %v242
    %v251 = vpack.c.bf16 %v247, %v243
    %v252 = vpack.c.bf16 %v248, %v244
    %v253 = vld [vmem:[#allocation7] sm:$0xff]
    %v254 = vld [vmem:[#allocation7 + $0x8] sm:$0xff]
    %v255 = vld [vmem:[%s4] sm:$0x1]
    %v257 = vlaneseq
    %v258 = vshrl.u32 %v257, 7
    %v259 = vsub.s32 0, %v258
    %v260 = vrot.slane %v255, %v259
    %v264 = vunpack.c.l.b16 %v253
    %v265 = vunpack.c.h.b16 %v253
    %v266 = vunpack.c.l.b16 %v254
    %v267 = vunpack.c.h.b16 %v254
    %v268 = vpack.c.b16 %v264, %v264
    %v269 = vpack.c.b16 %v265, %v265
    %v270 = vpack.c.b16 %v266, %v266
    %v271 = vpack.c.b16 %v267, %v267
    %276 = vmatprep.subr.bf16.mxu0 0
    %277 = vmatpush1.bf16.xpose.msra.mxu0 0
    %278 = vmatprep.subr.bf16.mxu0 0
    %279 = vmatpush1.bf16.xpose.msra.mxu0 0
    %280 = vmatprep.subr.bf16.mxu0 0
    %281 = vmatpush1.bf16.xpose.msra.mxu0 0
    %282 = vmatprep.subr.bf16.mxu0 0
    %283 = vmatpush1.bf16.xpose.msra.mxu0 0
    %284 = vmatprep.subr.bf16.mxu0 0
    %285 = vmatpush1.bf16.xpose.msra.mxu0 0
    %286 = vmatprep.subr.bf16.mxu0 0
    %287 = vmatpush1.bf16.xpose.msra.mxu0 0
    %288 = vmatprep.subr.bf16.mxu0 0
    %289 = vmatpush1.bf16.xpose.msra.mxu0 0
    %290 = vmatprep.subr.bf16.mxu0 %v269
    %291 = vmatpush1.bf16.xpose.msra.mxu0 %v268
    %292 = vmatprep.subr.bf16.mxu0 0
    %293 = vmatpush2.bf16.xpose.msra.mxu0 0
    %294 = vmatprep.subr.bf16.mxu0 0
    %295 = vmatpush2.bf16.xpose.msra.mxu0 0
    %296 = vmatprep.subr.bf16.mxu0 0
    %297 = vmatpush2.bf16.xpose.msra.mxu0 0
    %298 = vmatprep.subr.bf16.mxu0 0
    %299 = vmatpush2.bf16.xpose.msra.mxu0 0
    %300 = vmatprep.subr.bf16.mxu0 0
    %301 = vmatpush2.bf16.xpose.msra.mxu0 0
    %302 = vmatprep.subr.bf16.mxu0 0
    %303 = vmatpush2.bf16.xpose.msra.mxu0 0
    %304 = vmatprep.subr.bf16.mxu0 0
    %305 = vmatpush2.bf16.xpose.msra.mxu0 0
    %306 = vmatprep.subr.bf16.mxu0 0
    %307 = vmatpush2.bf16.xpose.msra.mxu0 0
    %308 = vmatprep.mubr.bf16.mxu0 %v250
    %309 = vmatmul.mubr.bf16.gmra.mxu0 %v249
    %v310 = vpop.f32.mrf.mxu0
    %v311 = vadd.f32 %v260, %v310
    %v312 = vpop.f32.mrf.mxu0
    %v313 = vpop.f32.mrf.mxu0
    %v314 = vadd.f32 %v260, %v313
    %v315 = vpop.f32.mrf.mxu0
    %316 = vdwg.mxu0
    %317 = vmatprep.subr.bf16.mxu0 0
    %318 = vmatpush1.bf16.xpose.msra.mxu0 0
    %319 = vmatprep.subr.bf16.mxu0 0
    %320 = vmatpush1.bf16.xpose.msra.mxu0 0
    %321 = vmatprep.subr.bf16.mxu0 0
    %322 = vmatpush1.bf16.xpose.msra.mxu0 0
    %323 = vmatprep.subr.bf16.mxu0 0
    %324 = vmatpush1.bf16.xpose.msra.mxu0 0
    %325 = vmatprep.subr.bf16.mxu0 0
    %326 = vmatpush1.bf16.xpose.msra.mxu0 0
    %327 = vmatprep.subr.bf16.mxu0 0
    %328 = vmatpush1.bf16.xpose.msra.mxu0 0
    %329 = vmatprep.subr.bf16.mxu0 0
    %330 = vmatpush1.bf16.xpose.msra.mxu0 0
    %331 = vmatprep.subr.bf16.mxu0 %v271
    %332 = vmatpush1.bf16.xpose.msra.mxu0 %v270
    %333 = vmatprep.subr.bf16.mxu0 0
    %334 = vmatpush2.bf16.xpose.msra.mxu0 0
    %335 = vmatprep.subr.bf16.mxu0 0
    %336 = vmatpush2.bf16.xpose.msra.mxu0 0
    %337 = vmatprep.subr.bf16.mxu0 0
    %338 = vmatpush2.bf16.xpose.msra.mxu0 0
    %339 = vmatprep.subr.bf16.mxu0 0
    %340 = vmatpush2.bf16.xpose.msra.mxu0 0
    %341 = vmatprep.subr.bf16.mxu0 0
    %342 = vmatpush2.bf16.xpose.msra.mxu0 0
    %343 = vmatprep.subr.bf16.mxu0 0
    %344 = vmatpush2.bf16.xpose.msra.mxu0 0
    %345 = vmatprep.subr.bf16.mxu0 0
    %346 = vmatpush2.bf16.xpose.msra.mxu0 0
    %347 = vmatprep.subr.bf16.mxu0 0
    %348 = vmatpush2.bf16.xpose.msra.mxu0 0
    %349 = vmatprep.mubr.bf16.mxu0 %v252
    %350 = vmatmul.mubr.bf16.gmra.mxu0 %v251
    %v351 = vpop.f32.mrf.mxu0
    %v352 = vadd.f32 %v311, %v351
    %v353 = vpop.f32.mrf.mxu0
    %v354 = vpop.f32.mrf.mxu0
    %v355 = vadd.f32 %v314, %v354
    %v356 = vpop.f32.mrf.mxu0
    %357 = vdwg.mxu0
    %vm358 = vcmask 64512
    %359 = vst.msk [vmem:[%s5] sm:$0xff] %vm358, %v352
    %360 = vst.msk [vmem:[%s5 + $0x8] sm:$0xff] %vm358, %v355
    %v361 = vlaneseq
    %v362 = vand.u32 %v361, 127
    %vm363 = vcmp.lt.s32.totalorder %v362, 8
    %v364 = vsel %vm363, %v352, -inf
    %v365 = vsel %vm363, %v355, -inf
    %v366 = vsel %vm358, %v364, -inf
    %367 = vmax.xlane.f32.xlu0 %v366
    %v368 = vpop.xlane.xlu0 %367
    %v369 = vsel %vm358, %v365, -inf
    %370 = vmax.xlane.f32.xlu0 %v369
    %v371 = vpop.xlane.xlu0 %370
    %vm372 = vcmp.eq.f32.partialorder %v364, %v368
    %vm373 = vcmp.eq.f32.partialorder %v365, %v371
    %v374 = vsel %vm372, %v362, 8
    %v375 = vsel %vm373, %v362, 8
    %v376 = vsel %vm358, %v374, 2147483647
    %v377 = vand.u32 %v376, 65535
    %v378 = vshra.s32 %v376, 16
    %v379 = vcvt.s32.f32 %v377
    %v380 = vcvt.s32.f32 %v378
    %381 = vmin.xlane.f32.xlu0 %v380
    %v382 = vpop.xlane.xlu0 %381
    %vm383 = vcmp.eq.f32.partialorder %v380, %v382
    %v384 = vsel %vm383, %v379, inf
    %385 = vmin.xlane.f32.xlu0 %v384
    %v386 = vpop.xlane.xlu0 %385
    %v387 = vcvt.f32.s32 %v386
    %v388 = vcvt.f32.s32 %v382
    %v389 = vshll.u32 %v388, 16
    %v390 = vadd.s32 %v389, %v387
    %v391 = vsel %vm358, %v375, 2147483647
    %v392 = vand.u32 %v391, 65535
    %v393 = vshra.s32 %v391, 16
    %v394 = vcvt.s32.f32 %v392
    %v395 = vcvt.s32.f32 %v393
    %396 = vmin.xlane.f32.xlu0 %v395
    %v397 = vpop.xlane.xlu0 %396
    %vm398 = vcmp.eq.f32.partialorder %v395, %v397
    %v399 = vsel %vm398, %v394, inf
    %400 = vmin.xlane.f32.xlu0 %v399
    %v401 = vpop.xlane.xlu0 %400
    %v402 = vcvt.f32.s32 %v401
    %v403 = vcvt.f32.s32 %v397
    %v404 = vshll.u32 %v403, 16
    %v405 = vadd.s32 %v404, %v402
    %vm406 = vcmask 7168
    %407 = vst.msk [vmem:[%s6] sm:$0xff] %vm406, %v390
    %408 = vst.msk [vmem:[%s6 + $0x8] sm:$0xff] %vm406, %v405
    // Predicated region
    $region38: #{tpu_custom_call.1} parent=1 // pred_check
      _
    $region39: #{tpu_custom_call.1} parent=1 // pred_check_branch
      %410 = sbr.rel (0) target = $region41
    $region40: #{tpu_custom_call.1} parent=1 // pred_region
      _
    $region41: #{tpu_custom_call.1} parent=1 // pred_fallthru
      _
    // Predicated region
    $region42: #{tpu_custom_call.1} parent=1 // pred_check
      _
    $region43: #{tpu_custom_call.1} parent=1 // pred_check_branch
      %412 = sbr.rel (0) target = $region45
    $region44: #{tpu_custom_call.1} parent=1 // pred_region
      _
    $region45: #{tpu_custom_call.1} parent=1 // pred_fallthru
      _
    // Predicated region
    $region46: #{tpu_custom_call.1} parent=1 // pred_check
      _
    $region47: #{tpu_custom_call.1} parent=1 // pred_check_branch
      %414 = sbr.rel (0) target = $region49
    $region48: #{tpu_custom_call.1} parent=1 // pred_region
      _
    $region49: #{tpu_custom_call.1} parent=1 // pred_fallthru
      _
    // Predicated region
    $region50: #{tpu_custom_call.1} parent=1 // pred_check
      _
    $region51: #{tpu_custom_call.1} parent=1 // pred_check_branch
      %416 = sbr.rel (0) target = $region53
    $region52: #{tpu_custom_call.1} parent=1 // pred_region
      _
    $region53: #{tpu_custom_call.1} parent=1 // pred_fallthru
      _
    %417 = vsyncpa [#allocation3], 1
    %418 = vsyncpa [#allocation5], 1
    %419 = vsyncpa [#allocation8], 1

</llo_original>
